<compile_context>
chip_gen: v6e
topology: v6e:2x2x1
jax: 0.10.0
libtpu: 0.0.40
codegen_flags: <defaults>
</compile_context>

<pallas_src>
import jax
import jax.numpy as jnp
from jax.experimental import pallas as pl
from jax.experimental.pallas import tpu as pltpu


EMBED_DIM = 512
PATCH = 8
VMEM_LIMIT = 48 * 1024 * 1024   # > 32MiB scoped default, < v7x 64MiB physical


def _round_up(x, m):
    return (x + m - 1) // m * m


# --------------------------------------------------------------------------
# Matmul + bias  (bf16 operands, f32 accumulation directly in the output tile)
# --------------------------------------------------------------------------

def _matmul_bias_kernel(x_ref, w_ref, b_ref, o_ref):
    k = pl.program_id(2)
    prod = jnp.dot(x_ref[...], w_ref[...], preferred_element_type=jnp.float32)

    @pl.when(k == 0)
    def _():
        o_ref[...] = prod + b_ref[...]          # bias folded into first K step

    @pl.when(k != 0)
    def _():
        o_ref[...] = o_ref[...] + prod          # f32 output block is resident


def matmul_bias(x, w, b, *, tm=256, tn=512, tk=512):
    """x:(M,K) @ w:(K,N) + b:(N,) -> (M,N) f32.  Tiled over (M, N, K)."""
    M, K = x.shape
    K2, N = w.shape
    assert K == K2
    # Shapes in this model are multiples of 128/512 on K and N; fall back to a
    # single full block only for the small patch-embed K (=192).
    tk_e = tk if K % tk == 0 else K
    tn_e = tn if N % tn == 0 else N
    tm_e = tm if M % tm == 0 else min(_round_up(M, 8), tm)
    Mp = _round_up(M, tm_e)
    if Mp != M:
        x = jnp.pad(x, ((0, Mp - M), (0, 0)))
    xb = x.astype(jnp.bfloat16)
    wb = w.astype(jnp.bfloat16)
    b2 = b.reshape(1, N).astype(jnp.float32)

    out = pl.pallas_call(
        _matmul_bias_kernel,
        out_shape=jax.ShapeDtypeStruct((Mp, N), jnp.float32),
        grid_spec=pltpu.PrefetchScalarGridSpec(
            num_scalar_prefetch=0,
            grid=(Mp // tm_e, N // tn_e, K // tk_e),
            in_specs=[
                pl.BlockSpec((tm_e, tk_e), lambda i, j, k: (i, k)),
                pl.BlockSpec((tk_e, tn_e), lambda i, j, k: (k, j)),
                pl.BlockSpec((1, tn_e), lambda i, j, k: (0, j)),
            ],
            out_specs=pl.BlockSpec((tm_e, tn_e), lambda i, j, k: (i, j)),
        ),
        compiler_params=pltpu.CompilerParams(
            dimension_semantics=("parallel", "parallel", "arbitrary"),
            vmem_limit_bytes=VMEM_LIMIT),
    )(xb, wb, b2)
    return out[:M] if Mp != M else out


# --------------------------------------------------------------------------
# Flash-style cross attention (online softmax over KV tiles)
# --------------------------------------------------------------------------

def _flash_xattn_kernel(q_ref, k_ref, v_ref, o_ref, m_sc, l_sc, acc_sc):
    kv = pl.program_id(2)

    @pl.when(kv == 0)
    def _():
        m_sc[...] = jnp.full_like(m_sc, -jnp.inf)
        l_sc[...] = jnp.zeros_like(l_sc)
        acc_sc[...] = jnp.zeros_like(acc_sc)

    q = q_ref[0]                                   # (tq, D) bf16 (scale folded)
    k = k_ref[0]
    v = v_ref[0]
    s = jax.lax.dot_general(q, k, (((1,), (1,)), ((), ())),
                            preferred_element_type=jnp.float32)   # (tq, tkv)
    m_prev = m_sc[...]
    m_new = jnp.maximum(m_prev, jnp.max(s, axis=-1, keepdims=True))
    alpha = jnp.exp(m_prev - m_new)
    p = jnp.exp(s - m_new)
    l_sc[...] = alpha * l_sc[...] + jnp.sum(p, axis=-1, keepdims=True)
    acc_sc[...] = alpha * acc_sc[...] + jnp.dot(
        p.astype(v.dtype), v, preferred_element_type=jnp.float32)
    m_sc[...] = m_new

    @pl.when(kv == pl.num_programs(2) - 1)
    def _():
        o_ref[0] = (acc_sc[...] *
                    pl.reciprocal(l_sc[...], approx=True)).astype(o_ref.dtype)


def cross_attention(q, k, v, *, tq=128, tkv=128):
    """q (content), k/v (style): (B, N, D) -> (B, N, D) f32."""
    B, Nq, D = q.shape
    _, Nk, _ = k.shape
    tq_e = tq if Nq % tq == 0 else Nq
    tkv_e = tkv if Nk % tkv == 0 else Nk
    qb = q.astype(jnp.bfloat16)
    kb = k.astype(jnp.bfloat16)
    vb = v.astype(jnp.bfloat16)
    return pl.pallas_call(
        _flash_xattn_kernel,
        out_shape=jax.ShapeDtypeStruct((B, Nq, D), jnp.float32),
        grid_spec=pltpu.PrefetchScalarGridSpec(
            num_scalar_prefetch=0,
            grid=(B, Nq // tq_e, Nk // tkv_e),
            in_specs=[
                pl.BlockSpec((1, tq_e, D), lambda b, i, j: (b, i, 0)),
                pl.BlockSpec((1, tkv_e, D), lambda b, i, j: (b, j, 0)),
                pl.BlockSpec((1, tkv_e, D), lambda b, i, j: (b, j, 0)),
            ],
            out_specs=pl.BlockSpec((1, tq_e, D), lambda b, i, j: (b, i, 0)),
            scratch_shapes=[
                pltpu.VMEM((tq_e, 1), jnp.float32),
                pltpu.VMEM((tq_e, 1), jnp.float32),
                pltpu.VMEM((tq_e, D), jnp.float32),
            ],
        ),
        compiler_params=pltpu.CompilerParams(
            dimension_semantics=("parallel", "parallel", "arbitrary"),
            vmem_limit_bytes=VMEM_LIMIT),
    )(qb, kb, vb)


# --------------------------------------------------------------------------
# Residual add + LayerNorm (row tiled)
# --------------------------------------------------------------------------

def _add_layernorm_kernel(x_ref, r_ref, g_ref, b_ref, o_ref):
    x = x_ref[...] + r_ref[...]
    mean = jnp.mean(x, axis=-1, keepdims=True)
    var = jnp.mean(jnp.square(x - mean), axis=-1, keepdims=True)
    o_ref[...] = ((x - mean) * jax.lax.rsqrt(var + 1e-5)
                  * g_ref[...] + b_ref[...]).astype(o_ref.dtype)


def add_layernorm(x, res, gamma, beta, *, tm=512):
    """LayerNorm(x + res) over the last dim.  x, res: (M, D) f32."""
    M, D = x.shape
    tm_e = tm if M % tm == 0 else min(_round_up(M, 8), tm)
    Mp = _round_up(M, tm_e)
    if Mp != M:
        x = jnp.pad(x, ((0, Mp - M), (0, 0)))
        res = jnp.pad(res, ((0, Mp - M), (0, 0)))
    out = pl.pallas_call(
        _add_layernorm_kernel,
        out_shape=jax.ShapeDtypeStruct((Mp, D), jnp.float32),
        grid_spec=pltpu.PrefetchScalarGridSpec(
            num_scalar_prefetch=0,
            grid=(Mp // tm_e,),
            in_specs=[
                pl.BlockSpec((tm_e, D), lambda i: (i, 0)),
                pl.BlockSpec((tm_e, D), lambda i: (i, 0)),
                pl.BlockSpec((1, D), lambda i: (0, 0)),
                pl.BlockSpec((1, D), lambda i: (0, 0)),
            ],
            out_specs=pl.BlockSpec((tm_e, D), lambda i: (i, 0)),
        ),
        compiler_params=pltpu.CompilerParams(
            dimension_semantics=("parallel",),
            vmem_limit_bytes=VMEM_LIMIT),
    )(x, res, gamma.reshape(1, D), beta.reshape(1, D))
    return out[:M] if Mp != M else out


# --------------------------------------------------------------------------
# Fused 3x3 / stride-2 / pad-1 conv (no 9x im2col tensor in HBM)
# --------------------------------------------------------------------------

def _conv3x3s2_kernel(x_ref, w_ref, b_ref, o_ref):
    # x_ref: (1, 2, 2, Hp2, Wp2, Cin) phase-decomposed padded input (bf16)
    # w_ref: (9, Cin, tn) bf16,  b_ref: (1, tn) f32,  o_ref: (1, Ho, Wo, tn) f32
    Ho = o_ref.shape[1]
    Wo = o_ref.shape[2]
    tn = o_ref.shape[3]
    acc = jnp.zeros((Ho * Wo, tn), jnp.float32)
    for di in range(3):
        for dj in range(3):
            a, ro = di % 2, di // 2
            c, co = dj % 2, dj // 2
            tap = x_ref[0, a, c, pl.ds(ro, Ho), pl.ds(co, Wo), :]  # (Ho, Wo, Cin)
            acc = acc + jnp.dot(tap.reshape(Ho * Wo, -1),
                                w_ref[di * 3 + dj],
                                preferred_element_type=jnp.float32)
    o_ref[0] = (acc + b_ref[...]).reshape(Ho, Wo, tn).astype(o_ref.dtype)


def conv3x3_s2(x, w_oihw, b, *, tn=512):
    """PyTorch Conv2d(k=3, s=2, p=1) on NHWC input, OIHW weight.

    The padded input is split into the four (row, col) parity phases in the
    wrapper (1x data, cheap strided slices); every 3x3 tap then becomes a
    contiguous in-kernel window of one phase, so no 9x-expanded im2col tensor
    ever touches HBM.
    """
    B, H, W, Cin = x.shape
    Cout = w_oihw.shape[0]
    Ho = (H + 2 - 3) // 2 + 1
    Wo = (W + 2 - 3) // 2 + 1
    # pad by 1 (conv padding), then up to even extents for the 2x2 phase split
    Hp = _round_up(H + 2, 2)
    Wp = _round_up(W + 2, 2)
    xp = jnp.pad(x, ((0, 0), (1, Hp - H - 1), (1, Wp - W - 1), (0, 0)))
    Hp2, Wp2 = Hp // 2, Wp // 2
    # phases[b, a, c, i, j] = xp[b, 2i + a, 2j + c]
    phases = xp.reshape(B, Hp2, 2, Wp2, 2, Cin).transpose(0, 2, 4, 1, 3, 5)
    phases = phases.astype(jnp.bfloat16)
    # OIHW -> (kh*kw, Cin, Cout), tap index = di*3 + dj
    w9 = jnp.transpose(w_oihw, (2, 3, 1, 0)).reshape(9, Cin, Cout)
    w9 = w9.astype(jnp.bfloat16)
    b2 = b.reshape(1, Cout).astype(jnp.float32)
    tn_e = tn if Cout % tn == 0 else Cout

    # TODO(synk): for very large feature maps (>>64x64 spatial) the per-image
    # full-spatial input block should additionally be row-tiled with a halo.
    return pl.pallas_call(
        _conv3x3s2_kernel,
        out_shape=jax.ShapeDtypeStruct((B, Ho, Wo, Cout), jnp.float32),
        grid_spec=pltpu.PrefetchScalarGridSpec(
            num_scalar_prefetch=0,
            grid=(Cout // tn_e, B),          # B innermost -> weight tile reused
            in_specs=[
                pl.BlockSpec((1, 2, 2, Hp2, Wp2, Cin),
                             lambda j, bb: (bb, 0, 0, 0, 0, 0)),
                pl.BlockSpec((9, Cin, tn_e), lambda j, bb: (0, 0, j)),
                pl.BlockSpec((1, tn_e), lambda j, bb: (0, j)),
            ],
            out_specs=pl.BlockSpec((1, Ho, Wo, tn_e),
                                   lambda j, bb: (bb, 0, 0, j)),
        ),
        compiler_params=pltpu.CompilerParams(
            dimension_semantics=("parallel", "parallel"),
            vmem_limit_bytes=VMEM_LIMIT),
    )(phases, w9, b2)


# --------------------------------------------------------------------------
# PatchEmbed: Conv2d(k=8, s=8) == pure-reshape im2col (non-overlapping patches)
# --------------------------------------------------------------------------

def _patches(x_nhwc, kh, kw):
    B, H, W, Cin = x_nhwc.shape
    Ho, Wo = H // kh, W // kw
    p = x_nhwc.reshape(B, Ho, kh, Wo, kw, Cin).transpose(0, 1, 3, 2, 4, 5)
    return p.reshape(B * Ho * Wo, kh * kw * Cin), Ho, Wo


# --------------------------------------------------------------------------
# StyTrans2 parameters (deterministic, synthetic) and forward
# --------------------------------------------------------------------------

def init_params(key):
    def dense(k, shape, scale=0.02):
        return jax.random.normal(k, shape, jnp.float32) * scale

    ks = jax.random.split(key, 12)
    p = {}
    # PatchEmbed.proj: Conv2d(3, 512, kernel_size=8, stride=8)
    p["embed_w"] = dense(ks[0], (EMBED_DIM, 3, PATCH, PATCH))
    p["embed_b"] = dense(ks[1], (EMBED_DIM,))
    # simplified transformer decoder block (d_model = 512)
    p["wq"] = dense(ks[2], (EMBED_DIM, EMBED_DIM))
    p["wk"] = dense(ks[3], (EMBED_DIM, EMBED_DIM))
    p["wv"] = dense(ks[4], (EMBED_DIM, EMBED_DIM))
    p["wo"] = dense(ks[5], (EMBED_DIM, EMBED_DIM))
    p["bq"] = jnp.zeros((EMBED_DIM,), jnp.float32)
    p["bk"] = jnp.zeros((EMBED_DIM,), jnp.float32)
    p["bv"] = jnp.zeros((EMBED_DIM,), jnp.float32)
    p["bo"] = jnp.zeros((EMBED_DIM,), jnp.float32)
    p["ln_g"] = jnp.ones((EMBED_DIM,), jnp.float32)
    p["ln_b"] = jnp.zeros((EMBED_DIM,), jnp.float32)
    # conv1: Conv2d(512, 1024, 3, stride=2, padding=1)
    p["conv1_w"] = dense(ks[6], (1024, EMBED_DIM, 3, 3))
    p["conv1_b"] = dense(ks[7], (1024,))
    # conv2: Conv2d(1024, 2048, 3, stride=2, padding=1)
    p["conv2_w"] = dense(ks[8], (2048, 1024, 3, 3))
    p["conv2_b"] = dense(ks[9], (2048,))
    return p


def stytrans2_forward(params, samples_c, samples_s):
    """samples_c / samples_s: (B, 3, H, W) float32 (NestedTensor.tensors)."""
    B = samples_c.shape[0]
    D = EMBED_DIM
    c_nhwc = jnp.transpose(samples_c, (0, 2, 3, 1))
    s_nhwc = jnp.transpose(samples_s, (0, 2, 3, 1))

    # --- PatchEmbed on content + style, fused into a single matmul launch ----
    pc, Hp, Wp = _patches(c_nhwc, PATCH, PATCH)
    ps, _, _ = _patches(s_nhwc, PATCH, PATCH)
    w_emb = jnp.transpose(params["embed_w"], (2, 3, 1, 0)).reshape(
        PATCH * PATCH * 3, D)
    emb = matmul_bias(jnp.concatenate([pc, ps], axis=0), w_emb,
                      params["embed_b"])
    Ntok = Hp * Wp
    Mrows = B * Ntok
    c_tok = emb[:Mrows]                       # (B*Ntok, 512)
    s_tok = emb[Mrows:]

    # TODO(synk): the external trans.Transformer (3-layer encoders + decoder,
    # CAPE positional encoding, checkpoint weights loaded from .pth) is not in
    # the given source; a single cross-attention decoder block (content queries
    # attend to style keys/values) + residual LayerNorm stands in, producing
    # the same [B, 512, H/8, W/8]-shaped feature map.
    scale = 1.0 / float(D) ** 0.5
    # fold the attention scale into the q projection (no per-score multiply)
    q = matmul_bias(c_tok, params["wq"] * scale, params["bq"] * scale)
    # fuse K and V projections (both consume the style stream)
    w_kv = jnp.concatenate([params["wk"], params["wv"]], axis=1)
    b_kv = jnp.concatenate([params["bk"], params["bv"]], axis=0)
    kv = matmul_bias(s_tok, w_kv, b_kv)
    k = kv[:, :D]
    v = kv[:, D:]

    attn = cross_attention(q.reshape(B, Ntok, D),
                           k.reshape(B, Ntok, D),
                           v.reshape(B, Ntok, D))
    attn = matmul_bias(attn.reshape(Mrows, D), params["wo"], params["bo"])
    hs_tok = add_layernorm(attn, c_tok, params["ln_g"], params["ln_b"])
    hs = hs_tok.reshape(B, Hp, Wp, D)          # NHWC of [B, 512, H/8, W/8]

    # --- conv1 (512 -> 1024, s=2, p=1), conv2 (1024 -> 2048, s=2, p=1) -------
    hs = conv3x3_s2(hs, params["conv1_w"], params["conv1_b"])
    hs = conv3x3_s2(hs, params["conv2_w"], params["conv2_b"])

    # PyTorch: hs.permute(0, 2, 3, 1).reshape(B, -1, 2048); NHWC already matches.
    return hs.reshape(B, -1, 2048)


if __name__ == "__main__":
    key = jax.random.PRNGKey(0)
    pkey, ckey, skey = jax.random.split(key, 3)

    params = init_params(pkey)

    # Small shapes consistent with the module: B=2, C=3, H=W=32 (patch grid 4x4).
    B, C, H, W = 2, 3, 32, 32
    samples_c = jax.random.normal(ckey, (B, C, H, W), jnp.float32)
    samples_s = jax.random.normal(skey, (B, C, H, W), jnp.float32)

    out = stytrans2_forward(params, samples_c, samples_s)
    out = jax.block_until_ready(out)

    # Expected: H/8 = 4 -> conv1 -> 2 -> conv2 -> 1 spatial; (B, 1, 2048).
    assert out.shape == (B, 1, 2048), out.shape
    assert out.dtype == jnp.float32
    assert bool(jnp.all(jnp.isfinite(out)))
    print("KERNEL_OK")
</pallas_src>

<mosaic_0001>
module attributes {stable_mosaic.version = 11 : i64} {
  func.func @_matmul_bias_kernel(%arg0: i32, %arg1: i32, %arg2: i32, %arg3: memref<64x192xbf16, #tpu.memory_space<vmem>>, %arg4: memref<192x512xbf16, #tpu.memory_space<vmem>>, %arg5: memref<1x512xf32, #tpu.memory_space<vmem>>, %arg6: memref<64x512xf32, #tpu.memory_space<vmem>>) attributes {dimension_semantics = [#tpu.dimension_semantics<parallel>, #tpu.dimension_semantics<parallel>, #tpu.dimension_semantics<arbitrary>], iteration_bounds = array<i64: 1, 1, 1>, scalar_prefetch = 0 : i64, scratch_operands = 0 : i64, tpu.core_type = #tpu.core_type<tc>, window_params = [{transform_indices = @transform_0, window_bounds = array<i64: 64, 192>}, {transform_indices = @transform_1, window_bounds = array<i64: 192, 512>}, {transform_indices = @transform_2, window_bounds = array<i64: 1, 512>}, {transform_indices = @transform_3, window_bounds = array<i64: 64, 512>}]} {
    %c0 = arith.constant 0 : index
    %c0_0 = arith.constant 0 : index
    %0 = vector.load %arg3[%c0, %c0_0] : memref<64x192xbf16, #tpu.memory_space<vmem>>, vector<64x192xbf16>
    %c0_1 = arith.constant 0 : index
    %c0_2 = arith.constant 0 : index
    %1 = vector.load %arg4[%c0_1, %c0_2] : memref<192x512xbf16, #tpu.memory_space<vmem>>, vector<192x512xbf16>
    %cst = arith.constant dense<0.000000e+00> : vector<64x512xf32>
    %2 = tpu.matmul %0, %1, %cst {dimension_numbers = #tpu.dot_dimension_numbers<[1], [0], [0], [1], [0, 0, 1, 1], [], []>} : vector<64x192xbf16>, vector<192x512xbf16>, vector<64x512xf32> -> vector<64x512xf32>
    %c0_i32 = arith.constant 0 : i32
    %3 = arith.cmpi eq, %arg2, %c0_i32 : i32
    %4 = arith.extui %3 : i1 to i32
    %c0_i32_3 = arith.constant 0 : i32
    %5 = arith.cmpi ne, %4, %c0_i32_3 : i32
    scf.if %5 {
      %c0_6 = arith.constant 0 : index
      %c0_7 = arith.constant 0 : index
      %9 = vector.load %arg5[%c0_6, %c0_7] : memref<1x512xf32, #tpu.memory_space<vmem>>, vector<1x512xf32>
      %10 = vector.broadcast %9 : vector<1x512xf32> to vector<64x512xf32>
      %11 = arith.addf %2, %10 : vector<64x512xf32>
      %c0_8 = arith.constant 0 : index
      %c0_9 = arith.constant 0 : index
      %12 = vector.load %arg6[%c0_8, %c0_9] : memref<64x512xf32, #tpu.memory_space<vmem>>, vector<64x512xf32>
      tpu.vector_store %arg6[%c0_8, %c0_9], %11 {strides = array<i32>} : memref<64x512xf32, #tpu.memory_space<vmem>>, vector<64x512xf32>,
    } else {
    }
    %c0_i32_4 = arith.constant 0 : i32
    %6 = arith.cmpi ne, %arg2, %c0_i32_4 : i32
    %7 = arith.extui %6 : i1 to i32
    %c0_i32_5 = arith.constant 0 : i32
    %8 = arith.cmpi ne, %7, %c0_i32_5 : i32
    scf.if %8 {
      %c0_6 = arith.constant 0 : index
      %c0_7 = arith.constant 0 : index
      %9 = vector.load %arg6[%c0_6, %c0_7] : memref<64x512xf32, #tpu.memory_space<vmem>>, vector<64x512xf32>
      %10 = arith.addf %9, %2 : vector<64x512xf32>
      %c0_8 = arith.constant 0 : index
      %c0_9 = arith.constant 0 : index
      %11 = vector.load %arg6[%c0_8, %c0_9] : memref<64x512xf32, #tpu.memory_space<vmem>>, vector<64x512xf32>
      tpu.vector_store %arg6[%c0_8, %c0_9], %10 {strides = array<i32>} : memref<64x512xf32, #tpu.memory_space<vmem>>, vector<64x512xf32>,
    } else {
    }
    return
  }
  func.func @transform_0(%arg0: i32, %arg1: i32, %arg2: i32) -> (i32, i32) {
    %c0_i32 = arith.constant 0 : i32
    return %arg0, %arg2 : i32, i32
  }
  func.func @transform_1(%arg0: i32, %arg1: i32, %arg2: i32) -> (i32, i32) {
    %c0_i32 = arith.constant 0 : i32
    return %arg2, %arg1 : i32, i32
  }
  func.func @transform_2(%arg0: i32, %arg1: i32, %arg2: i32) -> (i32, i32) {
    %c0_i32 = arith.constant 0 : i32
    %c0_i32_0 = arith.constant 0 : i32
    return %c0_i32, %arg1 : i32, i32
  }
  func.func @transform_3(%arg0: i32, %arg1: i32, %arg2: i32) -> (i32, i32) {
    %c0_i32 = arith.constant 0 : i32
    return %arg0, %arg1 : i32, i32
  }
}

</mosaic_0001>

<llo_original>
// kernel: tpu_custom_call.1
$region0: #{tpu_custom_call.1}
  #allocation0 [shape = 'u32[]', space=smem, size = 0x4, offset = 0x4, fixed_abs, tag = 'smem constant byte address 0x4 - core index']
  #allocation1 [shape = 'u32[144,128]{1,0:T(1,128)}', space=vmem, size = 0x12000, scoped, tag = 'internal scratch']
  %s0 = inlined_call_operand.hbm [shape: bf16[64,192], index: 0, kind: input, shape index: {}]
  %s1 = inlined_call_operand.hbm [shape: bf16[192,512], index: 1, kind: input, shape index: {}]
  %s2 = inlined_call_operand.hbm [shape: f32[1,512], index: 2, kind: input, shape index: {}]
  %s3 = inlined_call_operand.hbm [shape: f32[64,512], index: 3, kind: output, shape index: {}]
  %s4 = sld [smem:[#allocation0]]
  $region42: #{tpu_custom_call.1} parent=0
    _
  %s6 = ssub.s32 1, %s4
  %s7 = scalar_select 0, %s6, %s4
  $region1: #{tpu_custom_call.1} parent=0
    #allocation2 [shape = 'u8[32768]{0}', space=vmem, size = 0x8000, scoped, tag = 'input window, operand 0, single buffered']
    #allocation3 [shape = 's32[1]{0}', space=sflag, size = 0x4, scoped, tag = 'scoped memory for tpu_custom_call.1']
    #allocation4 [shape = 's32[1]{0}', space=sflag, size = 0x4, scoped, tag = 'scoped memory for tpu_custom_call.1']
    #allocation5 [shape = 'u8[196608]{0}', space=vmem, size = 0x30000, scoped, tag = 'input window, operand 1, single buffered']
    #allocation6 [shape = 's32[1]{0}', space=sflag, size = 0x4, scoped, tag = 'scoped memory for tpu_custom_call.1']
    #allocation7 [shape = 'u8[2048]{0}', space=vmem, size = 0x800, scoped, tag = 'input window, operand 2, single buffered']
    #allocation8 [shape = 'u8[131072]{0}', space=vmem, size = 0x20000, scoped, tag = 'output window, operand 0, single buffered']
    %8 = vsyncpa [#allocation3], 0
    %9 = vsyncpa [#allocation6], 0
    %10 = vsyncpa [#allocation4], 0
    // Predicated region
    $region2: #{tpu_custom_call.1} parent=1 // pred_check
      _
    $region3: #{tpu_custom_call.1} parent=1 // pred_check_branch
      %12 = sbr.rel (0) target = $region5
    $region4: #{tpu_custom_call.1} parent=1 // pred_region
      %s14 = ssub.s32 1024, 1024
      %15 = vsyncadd [#allocation3], %s14
      %s16 = sshll.u32 [#allocation2], 4
      %s17 = int_to_ptr.vmem [resolvable:$true] %s16
      %22 = dma.hbm_to_vmem [thread:$0]  %s0, 1024, %s17, [#allocation3], 128, 128, 8
    $region5: #{tpu_custom_call.1} parent=1 // pred_fallthru
      _
    // Predicated region
    $region6: #{tpu_custom_call.1} parent=1 // pred_check
      _
    $region7: #{tpu_custom_call.1} parent=1 // pred_check_branch
      %24 = sbr.rel (0) target = $region9
    $region8: #{tpu_custom_call.1} parent=1 // pred_region
      %s26 = ssub.s32 6144, 6144
      %27 = vsyncadd [#allocation6], %s26
      %s28 = sshll.u32 [#allocation5], 4
      %s29 = int_to_ptr.vmem [resolvable:$true] %s28
      %34 = dma.hbm_to_vmem [thread:$0]  %s1, 6144, %s29, [#allocation6], 256, 256, 16
    $region9: #{tpu_custom_call.1} parent=1 // pred_fallthru
      _
    // Predicated region
    $region10: #{tpu_custom_call.1} parent=1 // pred_check
      _
    $region11: #{tpu_custom_call.1} parent=1 // pred_check_branch
      %36 = sbr.rel (0) target = $region13
    $region12: #{tpu_custom_call.1} parent=1 // pred_region
      %s38 = ssub.s32 64, 64
      %39 = vsyncadd [#allocation6], %s38
      %s41 = sshll.u32 [#allocation7], 4
      %s42 = int_to_ptr.vmem [resolvable:$true] %s41
      %44 = dma.hbm_to_vmem [thread:$0]  %s2, 64, %s42, [#allocation6]
    $region13: #{tpu_custom_call.1} parent=1 // pred_fallthru
      _
    // Predicated region
    $region14: #{tpu_custom_call.1} parent=1 // pred_check
      _
    $region15: #{tpu_custom_call.1} parent=1 // pred_check_branch
      %46 = sbr.rel (0) target = $region17
    $region16: #{tpu_custom_call.1} parent=1 // pred_region
      %47 = dma.done [#allocation3], 1024
    $region17: #{tpu_custom_call.1} parent=1 // pred_fallthru
      _
    // Predicated region
    $region18: #{tpu_custom_call.1} parent=1 // pred_check
      _
    $region19: #{tpu_custom_call.1} parent=1 // pred_check_branch
      %49 = sbr.rel (0) target = $region21
    $region20: #{tpu_custom_call.1} parent=1 // pred_region
      %50 = dma.done [#allocation6], 6144
    $region21: #{tpu_custom_call.1} parent=1 // pred_fallthru
      _
    // Predicated region
    $region22: #{tpu_custom_call.1} parent=1 // pred_check
      _
    $region23: #{tpu_custom_call.1} parent=1 // pred_check_branch
      %52 = sbr.rel (0) target = $region25
    $region24: #{tpu_custom_call.1} parent=1 // pred_region
      %53 = dma.done [#allocation6], 64
    $region25: #{tpu_custom_call.1} parent=1 // pred_fallthru
      _
    %v55 = vld [vmem:[#allocation2] sm:$0xff]
    %v56 = vld [vmem:[#allocation2 + $0x8] sm:$0xff]
    %v57 = vld [vmem:[#allocation2 + $0x10] sm:$0xff]
    %v58 = vld [vmem:[#allocation2 + $0x18] sm:$0xff]
    %v59 = vld [vmem:[#allocation2 + $0x20] sm:$0xff]
    %v60 = vld [vmem:[#allocation2 + $0x28] sm:$0xff]
    %v61 = vld [vmem:[#allocation2 + $0x30] sm:$0xff]
    %v62 = vld [vmem:[#allocation2 + $0x38] sm:$0xff]
    %v63 = vld [vmem:[#allocation5] sm:$0xff]
    %v64 = vld [vmem:[#allocation5 + $0x8] sm:$0xff]
    %v65 = vld [vmem:[#allocation5 + $0x10] sm:$0xff]
    %v66 = vld [vmem:[#allocation5 + $0x18] sm:$0xff]
    %v67 = vld [vmem:[#allocation5 + $0x20] sm:$0xff]
    %v68 = vld [vmem:[#allocation5 + $0x28] sm:$0xff]
    %v69 = vld [vmem:[#allocation5 + $0x30] sm:$0xff]
    %v70 = vld [vmem:[#allocation5 + $0x38] sm:$0xff]
    %v71 = vld [vmem:[#allocation5 + $0x40] sm:$0xff]
    %v72 = vld [vmem:[#allocation5 + $0x48] sm:$0xff]
    %v73 = vld [vmem:[#allocation5 + $0x50] sm:$0xff]
    %v74 = vld [vmem:[#allocation5 + $0x58] sm:$0xff]
    %v75 = vld [vmem:[#allocation5 + $0x60] sm:$0xff]
    %v76 = vld [vmem:[#allocation5 + $0x68] sm:$0xff]
    %v77 = vld [vmem:[#allocation5 + $0x70] sm:$0xff]
    %v78 = vld [vmem:[#allocation5 + $0x78] sm:$0xff]
    %v79 = vld [vmem:[#allocation5 + $0x80] sm:$0xff]
    %v80 = vld [vmem:[#allocation5 + $0x88] sm:$0xff]
    %v81 = vld [vmem:[#allocation5 + $0x90] sm:$0xff]
    %v82 = vld [vmem:[#allocation5 + $0x98] sm:$0xff]
    %v83 = vld [vmem:[#allocation5 + $0xa0] sm:$0xff]
    %v84 = vld [vmem:[#allocation5 + $0xa8] sm:$0xff]
    %v85 = vld [vmem:[#allocation5 + $0xb0] sm:$0xff]
    %v86 = vld [vmem:[#allocation5 + $0xb8] sm:$0xff]
    %v87 = vld [vmem:[#allocation5 + $0xc0] sm:$0xff]
    %v88 = vld [vmem:[#allocation5 + $0xc8] sm:$0xff]
    %v89 = vld [vmem:[#allocation5 + $0xd0] sm:$0xff]
    %v90 = vld [vmem:[#allocation5 + $0xd8] sm:$0xff]
    %v91 = vld [vmem:[#allocation5 + $0xe0] sm:$0xff]
    %v92 = vld [vmem:[#allocation5 + $0xe8] sm:$0xff]
    %v93 = vld [vmem:[#allocation5 + $0xf0] sm:$0xff]
    %v94 = vld [vmem:[#allocation5 + $0xf8] sm:$0xff]
    %v95 = vld [vmem:[#allocation5 + $0x100] sm:$0xff]
    %v96 = vld [vmem:[#allocation5 + $0x108] sm:$0xff]
    %v97 = vld [vmem:[#allocation5 + $0x110] sm:$0xff]
    %v98 = vld [vmem:[#allocation5 + $0x118] sm:$0xff]
    %v99 = vld [vmem:[#allocation5 + $0x120] sm:$0xff]
    %v100 = vld [vmem:[#allocation5 + $0x128] sm:$0xff]
    %v101 = vld [vmem:[#allocation5 + $0x130] sm:$0xff]
    %v102 = vld [vmem:[#allocation5 + $0x138] sm:$0xff]
    %v103 = vld [vmem:[#allocation5 + $0x140] sm:$0xff]
    %v104 = vld [vmem:[#allocation5 + $0x148] sm:$0xff]
    %v105 = vld [vmem:[#allocation5 + $0x150] sm:$0xff]
    %v106 = vld [vmem:[#allocation5 + $0x158] sm:$0xff]
    %v107 = vld [vmem:[#allocation5 + $0x160] sm:$0xff]
    %v108 = vld [vmem:[#allocation5 + $0x168] sm:$0xff]
    %v109 = vld [vmem:[#allocation5 + $0x170] sm:$0xff]
    %v110 = vld [vmem:[#allocation5 + $0x178] sm:$0xff]
    %v119 = vunpack.c.l.b16 %v55
    %v120 = vunpack.c.h.b16 %v55
    %v121 = vunpack.c.l.b16 %v56
    %v122 = vunpack.c.h.b16 %v56
    %v123 = vunpack.c.l.b16 %v57
    %v124 = vunpack.c.h.b16 %v57
    %v125 = vunpack.c.l.b16 %v58
    %v126 = vunpack.c.h.b16 %v58
    %v127 = vunpack.c.l.b16 %v59
    %v128 = vunpack.c.h.b16 %v59
    %v129 = vunpack.c.l.b16 %v60
    %v130 = vunpack.c.h.b16 %v60
    %v131 = vunpack.c.l.b16 %v61
    %v132 = vunpack.c.h.b16 %v61
    %v133 = vunpack.c.l.b16 %v62
    %v134 = vunpack.c.h.b16 %v62
    %v135 = vpack.c.b16 %v121, %v119
    %v136 = vpack.c.b16 %v122, %v120
    %v137 = vpack.c.b16 %v125, %v123
    %v138 = vpack.c.b16 %v126, %v124
    %v139 = vpack.c.b16 %v129, %v127
    %v140 = vpack.c.b16 %v130, %v128
    %v141 = vpack.c.b16 %v133, %v131
    %v142 = vpack.c.b16 %v134, %v132
    %v195 = vunpack.c.l.b16 %v63
    %v196 = vunpack.c.h.b16 %v63
    %v197 = vunpack.c.l.b16 %v64
    %v198 = vunpack.c.h.b16 %v64
    %v199 = vunpack.c.l.b16 %v65
    %v200 = vunpack.c.h.b16 %v65
    %v201 = vunpack.c.l.b16 %v66
    %v202 = vunpack.c.h.b16 %v66
    %v203 = vunpack.c.l.b16 %v67
    %v204 = vunpack.c.h.b16 %v67
    %v205 = vunpack.c.l.b16 %v68
    %v206 = vunpack.c.h.b16 %v68
    %v207 = vunpack.c.l.b16 %v69
    %v208 = vunpack.c.h.b16 %v69
    %v209 = vunpack.c.l.b16 %v70
    %v210 = vunpack.c.h.b16 %v70
    %v211 = vunpack.c.l.b16 %v71
    %v212 = vunpack.c.h.b16 %v71
    %v213 = vunpack.c.l.b16 %v72
    %v214 = vunpack.c.h.b16 %v72
    %v215 = vunpack.c.l.b16 %v73
    %v216 = vunpack.c.h.b16 %v73
    %v217 = vunpack.c.l.b16 %v74
    %v218 = vunpack.c.h.b16 %v74
    %v219 = vunpack.c.l.b16 %v75
    %v220 = vunpack.c.h.b16 %v75
    %v221 = vunpack.c.l.b16 %v76
    %v222 = vunpack.c.h.b16 %v76
    %v223 = vunpack.c.l.b16 %v77
    %v224 = vunpack.c.h.b16 %v77
    %v225 = vunpack.c.l.b16 %v78
    %v226 = vunpack.c.h.b16 %v78
    %v227 = vunpack.c.l.b16 %v79
    %v228 = vunpack.c.h.b16 %v79
    %v229 = vunpack.c.l.b16 %v80
    %v230 = vunpack.c.h.b16 %v80
    %v231 = vunpack.c.l.b16 %v81
    %v232 = vunpack.c.h.b16 %v81
    %v233 = vunpack.c.l.b16 %v82
    %v234 = vunpack.c.h.b16 %v82
    %v235 = vunpack.c.l.b16 %v83
    %v236 = vunpack.c.h.b16 %v83
    %v237 = vunpack.c.l.b16 %v84
    %v238 = vunpack.c.h.b16 %v84
    %v239 = vunpack.c.l.b16 %v85
    %v240 = vunpack.c.h.b16 %v85
    %v241 = vunpack.c.l.b16 %v86
    %v242 = vunpack.c.h.b16 %v86
    %v243 = vunpack.c.l.b16 %v87
    %v244 = vunpack.c.h.b16 %v87
    %v245 = vunpack.c.l.b16 %v88
    %v246 = vunpack.c.h.b16 %v88
    %v247 = vunpack.c.l.b16 %v89
    %v248 = vunpack.c.h.b16 %v89
    %v249 = vunpack.c.l.b16 %v90
    %v250 = vunpack.c.h.b16 %v90
    %v251 = vunpack.c.l.b16 %v91
    %v252 = vunpack.c.h.b16 %v91
    %v253 = vunpack.c.l.b16 %v92
    %v254 = vunpack.c.h.b16 %v92
    %v255 = vunpack.c.l.b16 %v93
    %v256 = vunpack.c.h.b16 %v93
    %v257 = vunpack.c.l.b16 %v94
    %v258 = vunpack.c.h.b16 %v94
    %v259 = vunpack.c.l.b16 %v95
    %v260 = vunpack.c.h.b16 %v95
    %v261 = vunpack.c.l.b16 %v96
    %v262 = vunpack.c.h.b16 %v96
    %v263 = vunpack.c.l.b16 %v97
    %v264 = vunpack.c.h.b16 %v97
    %v265 = vunpack.c.l.b16 %v98
    %v266 = vunpack.c.h.b16 %v98
    %v267 = vunpack.c.l.b16 %v99
    %v268 = vunpack.c.h.b16 %v99
    %v269 = vunpack.c.l.b16 %v100
    %v270 = vunpack.c.h.b16 %v100
    %v271 = vunpack.c.l.b16 %v101
    %v272 = vunpack.c.h.b16 %v101
    %v273 = vunpack.c.l.b16 %v102
    %v274 = vunpack.c.h.b16 %v102
    %v275 = vunpack.c.l.b16 %v103
    %v276 = vunpack.c.h.b16 %v103
    %v277 = vunpack.c.l.b16 %v104
    %v278 = vunpack.c.h.b16 %v104
    %v279 = vunpack.c.l.b16 %v105
    %v280 = vunpack.c.h.b16 %v105
    %v281 = vunpack.c.l.b16 %v106
    %v282 = vunpack.c.h.b16 %v106
    %v283 = vunpack.c.l.b16 %v107
    %v284 = vunpack.c.h.b16 %v107
    %v285 = vunpack.c.l.b16 %v108
    %v286 = vunpack.c.h.b16 %v108
    %v287 = vunpack.c.l.b16 %v109
    %v288 = vunpack.c.h.b16 %v109
    %v289 = vunpack.c.l.b16 %v110
    %v290 = vunpack.c.h.b16 %v110
    %v291 = vpack.c.b16 %v199, %v195
    %v292 = vpack.c.b16 %v200, %v196
    %v293 = vpack.c.b16 %v201, %v197
    %v294 = vpack.c.b16 %v202, %v198
    %v295 = vpack.c.b16 %v207, %v203
    %v296 = vpack.c.b16 %v208, %v204
    %v297 = vpack.c.b16 %v209, %v205
    %v298 = vpack.c.b16 %v210, %v206
    %v299 = vpack.c.b16 %v215, %v211
    %v300 = vpack.c.b16 %v216, %v212
    %v301 = vpack.c.b16 %v217, %v213
    %v302 = vpack.c.b16 %v218, %v214
    %v303 = vpack.c.b16 %v223, %v219
    %v304 = vpack.c.b16 %v224, %v220
    %v305 = vpack.c.b16 %v225, %v221
    %v306 = vpack.c.b16 %v226, %v222
    %v307 = vpack.c.b16 %v231, %v227
    %v308 = vpack.c.b16 %v232, %v228
    %v309 = vpack.c.b16 %v233, %v229
    %v310 = vpack.c.b16 %v234, %v230
    %v311 = vpack.c.b16 %v239, %v235
    %v312 = vpack.c.b16 %v240, %v236
    %v313 = vpack.c.b16 %v241, %v237
    %v314 = vpack.c.b16 %v242, %v238
    %v315 = vpack.c.b16 %v247, %v243
    %v316 = vpack.c.b16 %v248, %v244
    %v317 = vpack.c.b16 %v249, %v245
    %v318 = vpack.c.b16 %v250, %v246
    %v319 = vpack.c.b16 %v255, %v251
    %v320 = vpack.c.b16 %v256, %v252
    %v321 = vpack.c.b16 %v257, %v253
    %v322 = vpack.c.b16 %v258, %v254
    %v323 = vpack.c.b16 %v263, %v259
    %v324 = vpack.c.b16 %v264, %v260
    %v325 = vpack.c.b16 %v265, %v261
    %v326 = vpack.c.b16 %v266, %v262
    %v327 = vpack.c.b16 %v271, %v267
    %v328 = vpack.c.b16 %v272, %v268
    %v329 = vpack.c.b16 %v273, %v269
    %v330 = vpack.c.b16 %v274, %v270
    %v331 = vpack.c.b16 %v279, %v275
    %v332 = vpack.c.b16 %v280, %v276
    %v333 = vpack.c.b16 %v281, %v277
    %v334 = vpack.c.b16 %v282, %v278
    %v335 = vpack.c.b16 %v287, %v283
    %v336 = vpack.c.b16 %v288, %v284
    %v337 = vpack.c.b16 %v289, %v285
    %v338 = vpack.c.b16 %v290, %v286
    %vm387 = vcmask 523264
    %v389 = vsel %vm387, %v136, 0
    %v392 = vsel %vm387, %v138, 0
    %v395 = vsel %vm387, %v140, 0
    %v398 = vsel %vm387, %v142, 0
    %400 = vmatprep.subr.bf16.mxu0 %v320
    %401 = vmatpush1.bf16.msra.mxu0 %v319
    %402 = vmatprep.subr.bf16.mxu0 %v316
    %403 = vmatpush1.bf16.msra.mxu0 %v315
    %404 = vmatprep.subr.bf16.mxu0 %v312
    %405 = vmatpush1.bf16.msra.mxu0 %v311
    %406 = vmatprep.subr.bf16.mxu0 %v308
    %407 = vmatpush1.bf16.msra.mxu0 %v307
    %408 = vmatprep.subr.bf16.mxu0 %v304
    %409 = vmatpush1.bf16.msra.mxu0 %v303
    %410 = vmatprep.subr.bf16.mxu0 %v300
    %411 = vmatpush1.bf16.msra.mxu0 %v299
    %412 = vmatprep.subr.bf16.mxu0 %v296
    %413 = vmatpush1.bf16.msra.mxu0 %v295
    %414 = vmatprep.subr.bf16.mxu0 %v292
    %415 = vmatpush1.bf16.msra.mxu0 %v291
    %416 = vmatprep.subr.bf16.mxu0 0
    %417 = vmatpush2.bf16.msra.mxu0 0
    %418 = vmatprep.subr.bf16.mxu0 0
    %419 = vmatpush2.bf16.msra.mxu0 0
    %420 = vmatprep.subr.bf16.mxu0 0
    %421 = vmatpush2.bf16.msra.mxu0 0
    %422 = vmatprep.subr.bf16.mxu0 0
    %423 = vmatpush2.bf16.msra.mxu0 0
    %424 = vmatprep.subr.bf16.mxu0 %v336
    %425 = vmatpush2.bf16.msra.mxu0 %v335
    %426 = vmatprep.subr.bf16.mxu0 %v332
    %427 = vmatpush2.bf16.msra.mxu0 %v331
    %428 = vmatprep.subr.bf16.mxu0 %v328
    %429 = vmatpush2.bf16.msra.mxu0 %v327
    %430 = vmatprep.subr.bf16.mxu0 %v324
    %431 = vmatpush2.bf16.msra.mxu0 %v323
    %432 = vmatprep.mubr.bf16.mxu0 %v389
    %433 = vmatmul.mubr.bf16.gmra.mxu0 %v135
    %v434 = vpop.f32.mrf.mxu0
    %v435 = vadd.f32 0.0, %v434
    %v436 = vpop.f32.mrf.mxu0
    %v437 = vadd.f32 0.0, %v436
    %v438 = vpop.f32.mrf.mxu0
    %v439 = vadd.f32 0.0, %v438
    %v440 = vpop.f32.mrf.mxu0
    %v441 = vadd.f32 0.0, %v440
    %442 = vmatprep.mubr.bf16.mxu0 %v392
    %443 = vmatmul.mubr.bf16.gmra.mxu0 %v137
    %v444 = vpop.f32.mrf.mxu0
    %v445 = vadd.f32 0.0, %v444
    %v446 = vpop.f32.mrf.mxu0
    %v447 = vadd.f32 0.0, %v446
    %v448 = vpop.f32.mrf.mxu0
    %v449 = vadd.f32 0.0, %v448
    %v450 = vpop.f32.mrf.mxu0
    %v451 = vadd.f32 0.0, %v450
    %452 = vmatprep.mubr.bf16.mxu0 %v395
    %453 = vmatmul.mubr.bf16.gmra.mxu0 %v139
    %v454 = vpop.f32.mrf.mxu0
    %v455 = vadd.f32 0.0, %v454
    %v456 = vpop.f32.mrf.mxu0
    %v457 = vadd.f32 0.0, %v456
    %v458 = vpop.f32.mrf.mxu0
    %v459 = vadd.f32 0.0, %v458
    %v460 = vpop.f32.mrf.mxu0
    %v461 = vadd.f32 0.0, %v460
    %462 = vmatprep.mubr.bf16.mxu0 %v398
    %463 = vmatmul.mubr.bf16.gmra.mxu0 %v141
    %v464 = vpop.f32.mrf.mxu0
    %v465 = vadd.f32 0.0, %v464
    %v466 = vpop.f32.mrf.mxu0
    %v467 = vadd.f32 0.0, %v466
    %v468 = vpop.f32.mrf.mxu0
    %v469 = vadd.f32 0.0, %v468
    %v470 = vpop.f32.mrf.mxu0
    %v471 = vadd.f32 0.0, %v470
    %472 = vdwg.mxu0
    %473 = vmatprep.subr.bf16.mxu0 %v322
    %474 = vmatpush1.bf16.msra.mxu0 %v321
    %475 = vmatprep.subr.bf16.mxu0 %v318
    %476 = vmatpush1.bf16.msra.mxu0 %v317
    %477 = vmatprep.subr.bf16.mxu0 %v314
    %478 = vmatpush1.bf16.msra.mxu0 %v313
    %479 = vmatprep.subr.bf16.mxu0 %v310
    %480 = vmatpush1.bf16.msra.mxu0 %v309
    %481 = vmatprep.subr.bf16.mxu0 %v306
    %482 = vmatpush1.bf16.msra.mxu0 %v305
    %483 = vmatprep.subr.bf16.mxu0 %v302
    %484 = vmatpush1.bf16.msra.mxu0 %v301
    %485 = vmatprep.subr.bf16.mxu0 %v298
    %486 = vmatpush1.bf16.msra.mxu0 %v297
    %487 = vmatprep.subr.bf16.mxu0 %v294
    %488 = vmatpush1.bf16.msra.mxu0 %v293
    %489 = vmatprep.subr.bf16.mxu0 0
    %490 = vmatpush2.bf16.msra.mxu0 0
    %491 = vmatprep.subr.bf16.mxu0 0
    %492 = vmatpush2.bf16.msra.mxu0 0
    %493 = vmatprep.subr.bf16.mxu0 0
    %494 = vmatpush2.bf16.msra.mxu0 0
    %495 = vmatprep.subr.bf16.mxu0 0
    %496 = vmatpush2.bf16.msra.mxu0 0
    %497 = vmatprep.subr.bf16.mxu0 %v338
    %498 = vmatpush2.bf16.msra.mxu0 %v337
    %499 = vmatprep.subr.bf16.mxu0 %v334
    %500 = vmatpush2.bf16.msra.mxu0 %v333
    %501 = vmatprep.subr.bf16.mxu0 %v330
    %502 = vmatpush2.bf16.msra.mxu0 %v329
    %503 = vmatprep.subr.bf16.mxu0 %v326
    %504 = vmatpush2.bf16.msra.mxu0 %v325
    %505 = vmatprep.mubr.bf16.mxu0 %v389
    %506 = vmatmul.mubr.bf16.gmra.mxu0 %v135
    %v507 = vpop.f32.mrf.mxu0
    %v508 = vadd.f32 0.0, %v507
    %v509 = vpop.f32.mrf.mxu0
    %v510 = vadd.f32 0.0, %v509
    %v511 = vpop.f32.mrf.mxu0
    %v512 = vadd.f32 0.0, %v511
    %v513 = vpop.f32.mrf.mxu0
    %v514 = vadd.f32 0.0, %v513
    %515 = vmatprep.mubr.bf16.mxu0 %v392
    %516 = vmatmul.mubr.bf16.gmra.mxu0 %v137
    %v517 = vpop.f32.mrf.mxu0
    %v518 = vadd.f32 0.0, %v517
    %v519 = vpop.f32.mrf.mxu0
    %v520 = vadd.f32 0.0, %v519
    %v521 = vpop.f32.mrf.mxu0
    %v522 = vadd.f32 0.0, %v521
    %v523 = vpop.f32.mrf.mxu0
    %v524 = vadd.f32 0.0, %v523
    %525 = vmatprep.mubr.bf16.mxu0 %v395
    %526 = vmatmul.mubr.bf16.gmra.mxu0 %v139
    %v527 = vpop.f32.mrf.mxu0
    %v528 = vadd.f32 0.0, %v527
    %v529 = vpop.f32.mrf.mxu0
    %v530 = vadd.f32 0.0, %v529
    %v531 = vpop.f32.mrf.mxu0
    %v532 = vadd.f32 0.0, %v531
    %v533 = vpop.f32.mrf.mxu0
    %v534 = vadd.f32 0.0, %v533
    %535 = vmatprep.mubr.bf16.mxu0 %v398
    %536 = vmatmul.mubr.bf16.gmra.mxu0 %v141
    %v537 = vpop.f32.mrf.mxu0
    %v538 = vadd.f32 0.0, %v537
    %v539 = vpop.f32.mrf.mxu0
    %v540 = vadd.f32 0.0, %v539
    %v541 = vpop.f32.mrf.mxu0
    %v542 = vadd.f32 0.0, %v541
    %v543 = vpop.f32.mrf.mxu0
    %v544 = vadd.f32 0.0, %v543
    %545 = vdwg.mxu0
    %p546 = scmp.eq.s32.totalorder 0, 0
    // Predicated region
    $region26: #{tpu_custom_call.1} parent=1 // pred_check
      %p547 = pneg %p546
    $region27: #{tpu_custom_call.1} parent=1 // pred_check_branch
      %549 = sbr.rel (%p547) target = $region29
    $region28: #{tpu_custom_call.1} parent=1 // pred_region
      %v550 = vld [vmem:[#allocation7] sm:$0xf]
      %v552 = vlaneseq
      %v553 = vshrl.u32 %v552, 7
      %v554 = vsub.s32 0, %v553
      %v555 = vrot.slane %v550, %v554
      %v556 = vlaneseq
      %v557 = vshrl.u32 %v556, 7
      %v558 = vsub.s32 1, %v557
      %v559 = vrot.slane %v550, %v558
      %v560 = vlaneseq
      %v561 = vshrl.u32 %v560, 7
      %v562 = vsub.s32 2, %v561
      %v563 = vrot.slane %v550, %v562
      %v564 = vlaneseq
      %v565 = vshrl.u32 %v564, 7
      %v566 = vsub.s32 3, %v565
      %v567 = vrot.slane %v550, %v566
      %v572 = vadd.f32 %v435, %v555
      %v573 = vadd.f32 %v437, %v559
      %v574 = vadd.f32 %v508, %v563
      %v575 = vadd.f32 %v510, %v567
      %v576 = vadd.f32 %v439, %v555
      %v577 = vadd.f32 %v441, %v559
      %v578 = vadd.f32 %v512, %v563
      %v579 = vadd.f32 %v514, %v567
      %v580 = vadd.f32 %v445, %v555
      %v581 = vadd.f32 %v447, %v559
      %v582 = vadd.f32 %v518, %v563
      %v583 = vadd.f32 %v520, %v567
      %v584 = vadd.f32 %v449, %v555
      %v585 = vadd.f32 %v451, %v559
      %v586 = vadd.f32 %v522, %v563
      %v587 = vadd.f32 %v524, %v567
      %v588 = vadd.f32 %v455, %v555
      %v589 = vadd.f32 %v457, %v559
      %v590 = vadd.f32 %v528, %v563
      %v591 = vadd.f32 %v530, %v567
      %v592 = vadd.f32 %v459, %v555
      %v593 = vadd.f32 %v461, %v559
      %v594 = vadd.f32 %v532, %v563
      %v595 = vadd.f32 %v534, %v567
      %v596 = vadd.f32 %v465, %v555
      %v597 = vadd.f32 %v467, %v559
      %v598 = vadd.f32 %v538, %v563
      %v599 = vadd.f32 %v540, %v567
      %v600 = vadd.f32 %v469, %v555
      %v601 = vadd.f32 %v471, %v559
      %v602 = vadd.f32 %v542, %v563
      %v603 = vadd.f32 %v544, %v567
      %604 = vst [vmem:[#allocation8] sm:$0xff] %v572
      %605 = vst [vmem:[#allocation8 + $0x8] sm:$0xff] %v573
      %606 = vst [vmem:[#allocation8 + $0x10] sm:$0xff] %v574
      %607 = vst [vmem:[#allocation8 + $0x18] sm:$0xff] %v575
      %608 = vst [vmem:[#allocation8 + $0x20] sm:$0xff] %v576
      %609 = vst [vmem:[#allocation8 + $0x28] sm:$0xff] %v577
      %610 = vst [vmem:[#allocation8 + $0x30] sm:$0xff] %v578
      %611 = vst [vmem:[#allocation8 + $0x38] sm:$0xff] %v579
      %612 = vst [vmem:[#allocation8 + $0x40] sm:$0xff] %v580
      %613 = vst [vmem:[#allocation8 + $0x48] sm:$0xff] %v581
      %614 = vst [vmem:[#allocation8 + $0x50] sm:$0xff] %v582
      %615 = vst [vmem:[#allocation8 + $0x58] sm:$0xff] %v583
      %616 = vst [vmem:[#allocation8 + $0x60] sm:$0xff] %v584
      %617 = vst [vmem:[#allocation8 + $0x68] sm:$0xff] %v585
      %618 = vst [vmem:[#allocation8 + $0x70] sm:$0xff] %v586
      %619 = vst [vmem:[#allocation8 + $0x78] sm:$0xff] %v587
      %620 = vst [vmem:[#allocation8 + $0x80] sm:$0xff] %v588
      %621 = vst [vmem:[#allocation8 + $0x88] sm:$0xff] %v589
      %622 = vst [vmem:[#allocation8 + $0x90] sm:$0xff] %v590
      %623 = vst [vmem:[#allocation8 + $0x98] sm:$0xff] %v591
      %624 = vst [vmem:[#allocation8 + $0xa0] sm:$0xff] %v592
      %625 = vst [vmem:[#allocation8 + $0xa8] sm:$0xff] %v593
      %626 = vst [vmem:[#allocation8 + $0xb0] sm:$0xff] %v594
      %627 = vst [vmem:[#allocation8 + $0xb8] sm:$0xff] %v595
      %628 = vst [vmem:[#allocation8 + $0xc0] sm:$0xff] %v596
      %629 = vst [vmem:[#allocation8 + $0xc8] sm:$0xff] %v597
      %630 = vst [vmem:[#allocation8 + $0xd0] sm:$0xff] %v598
      %631 = vst [vmem:[#allocation8 + $0xd8] sm:$0xff] %v599
      %632 = vst [vmem:[#allocation8 + $0xe0] sm:$0xff] %v600
      %633 = vst [vmem:[#allocation8 + $0xe8] sm:$0xff] %v601
      %634 = vst [vmem:[#allocation8 + $0xf0] sm:$0xff] %v602
      %635 = vst [vmem:[#allocation8 + $0xf8] sm:$0xff] %v603
    $region29: #{tpu_custom_call.1} parent=1 // pred_fallthru
      _
    %p636 = scmp.ne.s32.totalorder 0, 0
    // Predicated region
    $region30: #{tpu_custom_call.1} parent=1 // pred_check
      %p637 = pneg %p636
    $region31: #{tpu_custom_call.1} parent=1 // pred_check_branch
      %639 = sbr.rel (%p637) target = $region33
    $region32: #{tpu_custom_call.1} parent=1 // pred_region
      %v640 = vld [vmem:[#allocation8] sm:$0xff]
      %v641 = vld [vmem:[#allocation8 + $0x8] sm:$0xff]
      %v642 = vld [vmem:[#allocation8 + $0x10] sm:$0xff]
      %v643 = vld [vmem:[#allocation8 + $0x18] sm:$0xff]
      %v644 = vld [vmem:[#allocation8 + $0x20] sm:$0xff]
      %v645 = vld [vmem:[#allocation8 + $0x28] sm:$0xff]
      %v646 = vld [vmem:[#allocation8 + $0x30] sm:$0xff]
      %v647 = vld [vmem:[#allocation8 + $0x38] sm:$0xff]
      %v648 = vld [vmem:[#allocation8 + $0x40] sm:$0xff]
      %v649 = vld [vmem:[#allocation8 + $0x48] sm:$0xff]
      %v650 = vld [vmem:[#allocation8 + $0x50] sm:$0xff]
      %v651 = vld [vmem:[#allocation8 + $0x58] sm:$0xff]
      %v652 = vld [vmem:[#allocation8 + $0x60] sm:$0xff]
      %v653 = vld [vmem:[#allocation8 + $0x68] sm:$0xff]
      %v654 = vld [vmem:[#allocation8 + $0x70] sm:$0xff]
      %v655 = vld [vmem:[#allocation8 + $0x78] sm:$0xff]
      %v656 = vld [vmem:[#allocation8 + $0x80] sm:$0xff]
      %v657 = vld [vmem:[#allocation8 + $0x88] sm:$0xff]
      %v658 = vld [vmem:[#allocation8 + $0x90] sm:$0xff]
      %v659 = vld [vmem:[#allocation8 + $0x98] sm:$0xff]
      %v660 = vld [vmem:[#allocation8 + $0xa0] sm:$0xff]
      %v661 = vld [vmem:[#allocation8 + $0xa8] sm:$0xff]
      %v662 = vld [vmem:[#allocation8 + $0xb0] sm:$0xff]
      %v663 = vld [vmem:[#allocation8 + $0xb8] sm:$0xff]
      %v664 = vld [vmem:[#allocation8 + $0xc0] sm:$0xff]
      %v665 = vld [vmem:[#allocation8 + $0xc8] sm:$0xff]
      %v666 = vld [vmem:[#allocation8 + $0xd0] sm:$0xff]
      %v667 = vld [vmem:[#allocation8 + $0xd8] sm:$0xff]
      %v668 = vld [vmem:[#allocation8 + $0xe0] sm:$0xff]
      %v669 = vld [vmem:[#allocation8 + $0xe8] sm:$0xff]
      %v670 = vld [vmem:[#allocation8 + $0xf0] sm:$0xff]
      %v671 = vld [vmem:[#allocation8 + $0xf8] sm:$0xff]
      %v672 = vadd.f32 %v640, %v435
      %v673 = vadd.f32 %v641, %v437
      %v674 = vadd.f32 %v642, %v508
      %v675 = vadd.f32 %v643, %v510
      %v676 = vadd.f32 %v644, %v439
      %v677 = vadd.f32 %v645, %v441
      %v678 = vadd.f32 %v646, %v512
      %v679 = vadd.f32 %v647, %v514
      %v680 = vadd.f32 %v648, %v445
      %v681 = vadd.f32 %v649, %v447
      %v682 = vadd.f32 %v650, %v518
      %v683 = vadd.f32 %v651, %v520
      %v684 = vadd.f32 %v652, %v449
      %v685 = vadd.f32 %v653, %v451
      %v686 = vadd.f32 %v654, %v522
      %v687 = vadd.f32 %v655, %v524
      %v688 = vadd.f32 %v656, %v455
      %v689 = vadd.f32 %v657, %v457
      %v690 = vadd.f32 %v658, %v528
      %v691 = vadd.f32 %v659, %v530
      %v692 = vadd.f32 %v660, %v459
      %v693 = vadd.f32 %v661, %v461
      %v694 = vadd.f32 %v662, %v532
      %v695 = vadd.f32 %v663, %v534
      %v696 = vadd.f32 %v664, %v465
      %v697 = vadd.f32 %v665, %v467
      %v698 = vadd.f32 %v666, %v538
      %v699 = vadd.f32 %v667, %v540
      %v700 = vadd.f32 %v668, %v469
      %v701 = vadd.f32 %v669, %v471
      %v702 = vadd.f32 %v670, %v542
      %v703 = vadd.f32 %v671, %v544
      %704 = vst [vmem:[#allocation8] sm:$0xff] %v672
      %705 = vst [vmem:[#allocation8 + $0x8] sm:$0xff] %v673
      %706 = vst [vmem:[#allocation8 + $0x10] sm:$0xff] %v674
      %707 = vst [vmem:[#allocation8 + $0x18] sm:$0xff] %v675
      %708 = vst [vmem:[#allocation8 + $0x20] sm:$0xff] %v676
      %709 = vst [vmem:[#allocation8 + $0x28] sm:$0xff] %v677
      %710 = vst [vmem:[#allocation8 + $0x30] sm:$0xff] %v678
      %711 = vst [vmem:[#allocation8 + $0x38] sm:$0xff] %v679
      %712 = vst [vmem:[#allocation8 + $0x40] sm:$0xff] %v680
      %713 = vst [vmem:[#allocation8 + $0x48] sm:$0xff] %v681
      %714 = vst [vmem:[#allocation8 + $0x50] sm:$0xff] %v682
      %715 = vst [vmem:[#allocation8 + $0x58] sm:$0xff] %v683
      %716 = vst [vmem:[#allocation8 + $0x60] sm:$0xff] %v684
      %717 = vst [vmem:[#allocation8 + $0x68] sm:$0xff] %v685
      %718 = vst [vmem:[#allocation8 + $0x70] sm:$0xff] %v686
      %719 = vst [vmem:[#allocation8 + $0x78] sm:$0xff] %v687
      %720 = vst [vmem:[#allocation8 + $0x80] sm:$0xff] %v688
      %721 = vst [vmem:[#allocation8 + $0x88] sm:$0xff] %v689
      %722 = vst [vmem:[#allocation8 + $0x90] sm:$0xff] %v690
      %723 = vst [vmem:[#allocation8 + $0x98] sm:$0xff] %v691
      %724 = vst [vmem:[#allocation8 + $0xa0] sm:$0xff] %v692
      %725 = vst [vmem:[#allocation8 + $0xa8] sm:$0xff] %v693
      %726 = vst [vmem:[#allocation8 + $0xb0] sm:$0xff] %v694
      %727 = vst [vmem:[#allocation8 + $0xb8] sm:$0xff] %v695
      %728 = vst [vmem:[#allocation8 + $0xc0] sm:$0xff] %v696
      %729 = vst [vmem:[#allocation8 + $0xc8] sm:$0xff] %v697
      %730 = vst [vmem:[#allocation8 + $0xd0] sm:$0xff] %v698
      %731 = vst [vmem:[#allocation8 + $0xd8] sm:$0xff] %v699
      %732 = vst [vmem:[#allocation8 + $0xe0] sm:$0xff] %v700
      %733 = vst [vmem:[#allocation8 + $0xe8] sm:$0xff] %v701
      %734 = vst [vmem:[#allocation8 + $0xf0] sm:$0xff] %v702
      %735 = vst [vmem:[#allocation8 + $0xf8] sm:$0xff] %v703
    $region33: #{tpu_custom_call.1} parent=1 // pred_fallthru
      _
    // Predicated region
    $region34: #{tpu_custom_call.1} parent=1 // pred_check
      _
    $region35: #{tpu_custom_call.1} parent=1 // pred_check_branch
      %737 = sbr.rel (0) target = $region37
    $region36: #{tpu_custom_call.1} parent=1 // pred_region
      %s739 = ssub.s32 4096, 4096
      %740 = vsyncadd [#allocation4], %s739
      %s741 = sshll.u32 [#allocation8], 4
      %s742 = int_to_ptr.vmem [resolvable:$true] %s741
      %747 = dma.vmem_to_hbm [thread:$0]  %s742, 4096, %s3, [#allocation4], 512, 512, 32
    $region37: #{tpu_custom_call.1} parent=1 // pred_fallthru
      _
    // Predicated region
    $region38: #{tpu_custom_call.1} parent=1 // pred_check
      _
    $region39: #{tpu_custom_call.1} parent=1 // pred_check_branch
      %749 = sbr.rel (0) target = $region41
    $region40: #{tpu_custom_call.1} parent=1 // pred_region
      %750 = dma.done [#allocation4], 4096
    $region41: #{tpu_custom_call.1} parent=1 // pred_fallthru
      _
    %751 = vsyncpa [#allocation3], 1
    %752 = vsyncpa [#allocation6], 1
    %753 = vsyncpa [#allocation4], 1

</llo_original>
